<compile_context>
chip_gen: v5e
topology: v5e:2x2
jax: 0.10.0
libtpu: 0.0.40
codegen_flags: <defaults>
</compile_context>

<pallas_src>
import jax
import jax.numpy as jnp
from jax.experimental import pallas as pl
from jax.experimental.pallas import tpu as pltpu


_MIB = 1024 * 1024
_VMEM_TARGET = 48 * _MIB      # plan must fit this (portable: v7x has 64 MiB physical)
_VMEM_LIMIT_CAP = 56 * _MIB


def _round_up(x, m):
    return (x + m - 1) // m * m


def _ceil_div(a, b):
    return -(-a // b)


def _pick_tile(dim_pad, cap):
    """Largest multiple of 128 <= cap that divides dim_pad (dim_pad % 128 == 0)."""
    t = max(128, (min(cap, dim_pad) // 128) * 128)
    while dim_pad % t:
        t -= 128
    return t


# ---------------------------------------------------------------------------
# Kernels
# ---------------------------------------------------------------------------
def _encoder_kernel_fused(x_ref, w_ref, b_ref, o_ref):
    """nk == 1: single K block, no accumulator scratch needed."""
    y = jnp.dot(x_ref[...], w_ref[...], preferred_element_type=jnp.float32)
    o_ref[...] = jnp.tanh(y + b_ref[...]).astype(o_ref.dtype)


def _encoder_kernel_acc(x_ref, w_ref, b_ref, o_ref, acc_ref):
    """nk > 1: f32 accumulator, seeded with (first dot + bias) at k == 0."""
    k = pl.program_id(2)
    y = jnp.dot(x_ref[...], w_ref[...], preferred_element_type=jnp.float32)

    @pl.when(k == 0)
    def _init():
        acc_ref[...] = y + b_ref[...]

    @pl.when(k != 0)
    def _accum():
        acc_ref[...] += y

    @pl.when(k == pl.num_programs(2) - 1)
    def _finalize():
        o_ref[...] = jnp.tanh(acc_ref[...]).astype(o_ref.dtype)


# ---------------------------------------------------------------------------
# Parameter preparation (hoisted out of the forward path)
# ---------------------------------------------------------------------------
def prepare_encoder_params(weight_t, bias, compute_dtype=jnp.bfloat16):
    """Pad weight_t:(K,H) / bias:(H,) to 128 multiples and cast once.

    Returns (w_p:(K_pad,H_pad) compute_dtype, b_p:(1,H_pad) float32).
    """
    K, H = weight_t.shape
    K_pad = _round_up(K, 128)
    H_pad = _round_up(H, 128)
    w_p = jnp.pad(weight_t, ((0, K_pad - K), (0, H_pad - H))).astype(compute_dtype)
    b_p = jnp.pad(bias, (0, H_pad - H)).reshape(1, H_pad).astype(jnp.float32)
    return w_p, b_p


# ---------------------------------------------------------------------------
# Forward
# ---------------------------------------------------------------------------
def encoder_forward(x, w_p, b_p, hidden_size, *, out_dtype=None,
                    tb_cap=512, tn_cap=512, tk_cap=512,
                    allow_resident_weight=True):
    """x:(B,K); w_p/b_p from prepare_encoder_params; returns (B, hidden_size)."""
    B, K = x.shape
    K_pad, H_pad = w_p.shape
    assert K <= K_pad and _round_up(K, 128) == K_pad, "x does not match prepared weight"
    assert hidden_size <= H_pad

    compute_dtype = w_p.dtype
    out_dtype = out_dtype or x.dtype
    in_item = jnp.dtype(compute_dtype).itemsize
    out_item = jnp.dtype(out_dtype).itemsize
    # Packed-sublane row alignment: 16 rows for bf16, 32 for 8-bit, 8 for f32.
    row_align = 16 if in_item == 2 else (32 if in_item == 1 else 8)

    def est_vmem(tb, tk, tn, with_acc):
        # Double-buffered inputs/outputs (+ f32 accumulator scratch if used).
        e = 2 * (tb * tk * in_item + tk * tn * in_item + tn * 4 + tb * tn * out_item)
        if with_acc:
            e += tb * tn * 4
        return e

    # ---- choose TK / TN (weight tiling) ----
    resident = allow_resident_weight and est_vmem(128, K_pad, H_pad, False) <= _VMEM_TARGET
    if resident:
        TK, TN = K_pad, H_pad                 # whole weight in one block (nh = nk = 1)
    else:
        TK = _pick_tile(K_pad, tk_cap)        # divisors of the padded dims: no
        TN = _pick_tile(H_pad, tn_cap)        # under-coverage, no extra padding
    nk = K_pad // TK
    nh = H_pad // TN
    with_acc = nk > 1

    # ---- choose TB / nb (batch tiling: fit B, round to packed sublanes) ----
    nb = max(1, _ceil_div(B, tb_cap))
    TB = _round_up(_ceil_div(B, nb), row_align)
    while est_vmem(TB, TK, TN, with_acc) > _VMEM_TARGET and TB > row_align:
        nb += 1
        TB = _round_up(_ceil_div(B, nb), row_align)
    # v7x megacore: avoid a (1,1,nk) grid (one program) when there is enough work.
    if nb == 1 and nh == 1 and B > 128 and TB >= 2 * row_align:
        nb = 2
        TB = _round_up(_ceil_div(B, nb), row_align)
    B_pad = nb * TB

    est = est_vmem(TB, TK, TN, with_acc)
    vmem_limit = int(min(_VMEM_LIMIT_CAP, max(32 * _MIB, est * 5 // 4)))

    # ---- prepare activations (cast first so any pad copy moves fewer bytes) ----
    x_c = x.astype(compute_dtype)
    if B_pad != B or K_pad != K:
        x_c = jnp.pad(x_c, ((0, B_pad - B), (0, K_pad - K)))

    # ---- kernel / specs ----
    if with_acc:
        kernel = _encoder_kernel_acc
        scratch = [pltpu.VMEM((TB, TN), jnp.float32)]
    else:
        kernel = _encoder_kernel_fused
        scratch = []

    in_specs = [
        pl.BlockSpec((TB, TK), lambda i, j, k: (i, k)),   # x tile
        pl.BlockSpec((TK, TN), lambda i, j, k: (k, j)),   # weight tile (constant when resident)
        pl.BlockSpec((1, TN), lambda i, j, k: (0, j)),    # bias tile
    ]
    out_spec = pl.BlockSpec((TB, TN), lambda i, j, k: (i, j))

    w_passes = 1 if (nh == 1 and nk == 1) else nb
    cost = pl.CostEstimate(
        flops=2 * B_pad * K_pad * H_pad,
        transcendentals=B_pad * H_pad,
        bytes_accessed=(B_pad * K_pad * in_item
                        + w_passes * K_pad * H_pad * in_item
                        + H_pad * 4
                        + B_pad * H_pad * out_item),
    )

    out_p = pl.pallas_call(
        kernel,
        out_shape=jax.ShapeDtypeStruct((B_pad, H_pad), out_dtype),
        grid_spec=pltpu.PrefetchScalarGridSpec(
            num_scalar_prefetch=0,
            grid=(nb, nh, nk),
            in_specs=in_specs,
            out_specs=out_spec,
            scratch_shapes=scratch,
        ),
        compiler_params=pltpu.CompilerParams(
            dimension_semantics=("parallel", "parallel", "arbitrary"),
            vmem_limit_bytes=vmem_limit,
        ),
        cost_estimate=cost,
    )(x_c, w_p, b_p)

    return out_p[:B, :hidden_size]


# ---------------------------------------------------------------------------
# Demo / self-test
# ---------------------------------------------------------------------------
if __name__ == "__main__":
    key = jax.random.PRNGKey(0)
    k_x, k_w, k_b, k_x2, k_w2, k_b2 = jax.random.split(key, 6)

    # Small shapes consistent with the Encoder module.
    batch, input_size, hidden_size = 8, 16, 32
    bound = 1.0 / (input_size ** 0.5)

    x = jax.random.normal(k_x, (batch, input_size), dtype=jnp.float32)
    # PyTorch nn.Linear weight is (hidden, input); we keep the transposed layout.
    weight_t = jax.random.uniform(k_w, (input_size, hidden_size),
                                  minval=-bound, maxval=bound, dtype=jnp.float32)
    bias = jax.random.uniform(k_b, (hidden_size,),
                              minval=-bound, maxval=bound, dtype=jnp.float32)

    ref = jnp.tanh(x @ weight_t + bias[None, :])

    # f32 MXU path: exact check.
    w32, b32 = prepare_encoder_params(weight_t, bias, compute_dtype=jnp.float32)
    out32 = encoder_forward(x, w32, b32, hidden_size)
    jax.block_until_ready(out32)
    assert out32.shape == (batch, hidden_size)
    assert jnp.allclose(out32, ref, atol=1e-5, rtol=1e-5), "f32 mismatch vs reference"

    # Default bf16-compute path (f32 accumulation + f32 bias/tanh).
    wbf, bbf = prepare_encoder_params(weight_t, bias)
    outbf = encoder_forward(x, wbf, bbf, hidden_size)
    jax.block_until_ready(outbf)
    assert jnp.allclose(outbf, ref, atol=5e-2, rtol=5e-2), "bf16 mismatch vs reference"

    # Tiled multi-K path + tile-divisibility fix: H = K = 768 is not a multiple
    # of the 512 caps; residency disabled to force the accumulator kernel
    # (TN = TK = 384, nh = nk = 2) with a batch that is not a power of two.
    B2, K2, H2 = 300, 768, 768
    bound2 = 1.0 / (K2 ** 0.5)
    x2 = jax.random.normal(k_x2, (B2, K2), dtype=jnp.float32)
    w2 = jax.random.uniform(k_w2, (K2, H2), minval=-bound2, maxval=bound2,
                            dtype=jnp.float32)
    b2 = jax.random.uniform(k_b2, (H2,), minval=-bound2, maxval=bound2,
                            dtype=jnp.float32)
    ref2 = jnp.tanh(x2 @ w2 + b2[None, :])
    w2p, b2p = prepare_encoder_params(w2, b2)  # bf16 default
    out2 = encoder_forward(x2, w2p, b2p, H2, allow_resident_weight=False)
    jax.block_until_ready(out2)
    assert out2.shape == (B2, H2)
    assert jnp.allclose(out2, ref2, atol=5e-2, rtol=5e-2), "tiled path mismatch"

    print("KERNEL_OK")
</pallas_src>

<mosaic_0001>
module attributes {stable_mosaic.version = 11 : i64} {
  func.func @_encoder_kernel_fused(%arg0: i32, %arg1: i32, %arg2: i32, %arg3: memref<8x128xf32, #tpu.memory_space<vmem>>, %arg4: memref<128x128xf32, #tpu.memory_space<vmem>>, %arg5: memref<1x128xf32, #tpu.memory_space<vmem>>, %arg6: memref<8x128xf32, #tpu.memory_space<vmem>>) attributes {dimension_semantics = [#tpu.dimension_semantics<parallel>, #tpu.dimension_semantics<parallel>, #tpu.dimension_semantics<arbitrary>], iteration_bounds = array<i64: 1, 1, 1>, scalar_prefetch = 0 : i64, scratch_operands = 0 : i64, tpu.core_type = #tpu.core_type<tc>, window_params = [{transform_indices = @transform_0, window_bounds = array<i64: 8, 128>}, {transform_indices = @transform_1, window_bounds = array<i64: 128, 128>}, {transform_indices = @transform_2, window_bounds = array<i64: 1, 128>}, {transform_indices = @transform_3, window_bounds = array<i64: 8, 128>}]} {
    %c0 = arith.constant 0 : index
    %c0_0 = arith.constant 0 : index
    %0 = vector.load %arg3[%c0, %c0_0] : memref<8x128xf32, #tpu.memory_space<vmem>>, vector<8x128xf32>
    %c0_1 = arith.constant 0 : index
    %c0_2 = arith.constant 0 : index
    %1 = vector.load %arg4[%c0_1, %c0_2] : memref<128x128xf32, #tpu.memory_space<vmem>>, vector<128x128xf32>
    %cst = arith.constant dense<0.000000e+00> : vector<8x128xf32>
    %2 = tpu.matmul %0, %1, %cst {dimension_numbers = #tpu.dot_dimension_numbers<[1], [0], [0], [1], [0, 0, 1, 1], [], []>} : vector<8x128xf32>, vector<128x128xf32>, vector<8x128xf32> -> vector<8x128xf32>
    %c0_3 = arith.constant 0 : index
    %c0_4 = arith.constant 0 : index
    %3 = vector.load %arg5[%c0_3, %c0_4] : memref<1x128xf32, #tpu.memory_space<vmem>>, vector<1x128xf32>
    %4 = vector.broadcast %3 : vector<1x128xf32> to vector<8x128xf32>
    %5 = arith.addf %2, %4 : vector<8x128xf32>
    %6 = math.tanh %5 : vector<8x128xf32>
    %c0_5 = arith.constant 0 : index
    %c0_6 = arith.constant 0 : index
    %7 = vector.load %arg6[%c0_5, %c0_6] : memref<8x128xf32, #tpu.memory_space<vmem>>, vector<8x128xf32>
    tpu.vector_store %arg6[%c0_5, %c0_6], %6 {strides = array<i32>} : memref<8x128xf32, #tpu.memory_space<vmem>>, vector<8x128xf32>,
    return
  }
  func.func @transform_0(%arg0: i32, %arg1: i32, %arg2: i32) -> (i32, i32) {
    %c0_i32 = arith.constant 0 : i32
    return %arg0, %arg2 : i32, i32
  }
  func.func @transform_1(%arg0: i32, %arg1: i32, %arg2: i32) -> (i32, i32) {
    %c0_i32 = arith.constant 0 : i32
    return %arg2, %arg1 : i32, i32
  }
  func.func @transform_2(%arg0: i32, %arg1: i32, %arg2: i32) -> (i32, i32) {
    %c0_i32 = arith.constant 0 : i32
    %c0_i32_0 = arith.constant 0 : i32
    return %c0_i32, %arg1 : i32, i32
  }
  func.func @transform_3(%arg0: i32, %arg1: i32, %arg2: i32) -> (i32, i32) {
    %c0_i32 = arith.constant 0 : i32
    return %arg0, %arg1 : i32, i32
  }
}

</mosaic_0001>

<llo_original>
// kernel: tpu_custom_call.1
$region0: #{tpu_custom_call.1}
  #allocation0 [shape = 'u32[]', space=smem, size = 0x4, offset = 0x4, fixed_abs, tag = 'smem constant byte address 0x4 - core index']
  #allocation1 [shape = 'u32[72,128]{1,0:T(1,128)}', space=vmem, size = 0x9000, scoped, tag = 'internal scratch']
  %s0 = inlined_call_operand.hbm [shape: f32[8,128], index: 0, kind: input, shape index: {}]
  %s1 = inlined_call_operand.hbm [shape: f32[128,128], index: 1, kind: input, shape index: {}]
  %s2 = inlined_call_operand.vmem [shape: f32[1,128], index: 2, kind: input, shape index: {}]
  %s3 = inlined_call_operand.hbm [shape: f32[8,128], index: 3, kind: output, shape index: {}]
  %s4 = sld [smem:[#allocation0]]
  $region30: #{tpu_custom_call.1} parent=0
    _
  %s6 = ssub.s32 1, %s4
  %s7 = scalar_select 0, %s6, %s4
  $region1: #{tpu_custom_call.1} parent=0
    #allocation2 [shape = 'u8[4096]{0}', space=vmem, size = 0x1000, scoped, tag = 'input window, operand 0, single buffered']
    #allocation3 [shape = 's32[1]{0}', space=sflag, size = 0x4, scoped, tag = 'scoped memory for tpu_custom_call.1']
    #allocation4 [shape = 's32[1]{0}', space=sflag, size = 0x4, scoped, tag = 'scoped memory for tpu_custom_call.1']
    #allocation5 [shape = 'u8[65536]{0}', space=vmem, size = 0x10000, scoped, tag = 'input window, operand 1, single buffered']
    #allocation6 [shape = 's32[1]{0}', space=sflag, size = 0x4, scoped, tag = 'scoped memory for tpu_custom_call.1']
    #allocation7 [shape = 'u8[4096]{0}', space=vmem, size = 0x1000, scoped, tag = 'output window, operand 0, single buffered']
    %8 = vsyncpa [#allocation3], 0
    %9 = vsyncpa [#allocation6], 0
    %10 = vsyncpa [#allocation4], 0
    // Predicated region
    $region2: #{tpu_custom_call.1} parent=1 // pred_check
      _
    $region3: #{tpu_custom_call.1} parent=1 // pred_check_branch
      %12 = sbr.rel (0) target = $region5
    $region4: #{tpu_custom_call.1} parent=1 // pred_region
      %14 = vsyncadd [#allocation3], 0
      %s16 = sshll.u32 %s0, 4
      %s17 = int_to_ptr.hbm [resolvable:$true] %s16
      %s18 = sshll.u32 [#allocation2], 4
      %s19 = int_to_ptr.vmem [resolvable:$true] %s18
      %21 = dma.hbm_to_vmem [thread:$0]  %s17, 128, %s19, [#allocation3]
    $region5: #{tpu_custom_call.1} parent=1 // pred_fallthru
      _
    // Predicated region
    $region6: #{tpu_custom_call.1} parent=1 // pred_check
      _
    $region7: #{tpu_custom_call.1} parent=1 // pred_check_branch
      %23 = sbr.rel (0) target = $region9
    $region8: #{tpu_custom_call.1} parent=1 // pred_region
      %25 = vsyncadd [#allocation6], 0
      %s26 = sshll.u32 %s1, 4
      %s27 = int_to_ptr.hbm [resolvable:$true] %s26
      %s28 = sshll.u32 [#allocation5], 4
      %s29 = int_to_ptr.vmem [resolvable:$true] %s28
      %34 = dma.hbm_to_vmem [thread:$0]  %s27, 2048, %s29, [#allocation6], 128, 128, 8
    $region9: #{tpu_custom_call.1} parent=1 // pred_fallthru
      _
    // Predicated region
    $region10: #{tpu_custom_call.1} parent=1 // pred_check
      _
    $region11: #{tpu_custom_call.1} parent=1 // pred_check_branch
      %36 = sbr.rel (0) target = $region13
    $region12: #{tpu_custom_call.1} parent=1 // pred_region
      _
    $region13: #{tpu_custom_call.1} parent=1 // pred_fallthru
      _
    // Predicated region
    $region14: #{tpu_custom_call.1} parent=1 // pred_check
      _
    $region15: #{tpu_custom_call.1} parent=1 // pred_check_branch
      %38 = sbr.rel (0) target = $region17
    $region16: #{tpu_custom_call.1} parent=1 // pred_region
      %40 = dma.done [#allocation3], 128
    $region17: #{tpu_custom_call.1} parent=1 // pred_fallthru
      _
    // Predicated region
    $region18: #{tpu_custom_call.1} parent=1 // pred_check
      _
    $region19: #{tpu_custom_call.1} parent=1 // pred_check_branch
      %42 = sbr.rel (0) target = $region21
    $region20: #{tpu_custom_call.1} parent=1 // pred_region
      %44 = dma.done [#allocation6], 2048
    $region21: #{tpu_custom_call.1} parent=1 // pred_fallthru
      _
    %v45 = vld [vmem:[#allocation2] sm:$0xff]
    %v46 = vld [vmem:[#allocation5] sm:$0xff]
    %v47 = vld [vmem:[#allocation5 + $0x8] sm:$0xff]
    %v48 = vld [vmem:[#allocation5 + $0x10] sm:$0xff]
    %v49 = vld [vmem:[#allocation5 + $0x18] sm:$0xff]
    %v50 = vld [vmem:[#allocation5 + $0x20] sm:$0xff]
    %v51 = vld [vmem:[#allocation5 + $0x28] sm:$0xff]
    %v52 = vld [vmem:[#allocation5 + $0x30] sm:$0xff]
    %v53 = vld [vmem:[#allocation5 + $0x38] sm:$0xff]
    %v54 = vld [vmem:[#allocation5 + $0x40] sm:$0xff]
    %v55 = vld [vmem:[#allocation5 + $0x48] sm:$0xff]
    %v56 = vld [vmem:[#allocation5 + $0x50] sm:$0xff]
    %v57 = vld [vmem:[#allocation5 + $0x58] sm:$0xff]
    %v58 = vld [vmem:[#allocation5 + $0x60] sm:$0xff]
    %v59 = vld [vmem:[#allocation5 + $0x68] sm:$0xff]
    %v60 = vld [vmem:[#allocation5 + $0x70] sm:$0xff]
    %v61 = vld [vmem:[#allocation5 + $0x78] sm:$0xff]
    %v62 = vld [vmem:[%s2] sm:$0x1]
    %v64 = vperm.slane %v62, 0
    %66 = vmatpush.msra.mxu0 %v61
    %67 = vmatpush.msra.mxu0 %v60
    %68 = vmatpush.msra.mxu0 %v59
    %69 = vmatpush.msra.mxu0 %v58
    %70 = vmatpush.msra.mxu0 %v57
    %71 = vmatpush.msra.mxu0 %v56
    %72 = vmatpush.msra.mxu0 %v55
    %73 = vmatpush.msra.mxu0 %v54
    %74 = vmatpush.msra.mxu0 %v53
    %75 = vmatpush.msra.mxu0 %v52
    %76 = vmatpush.msra.mxu0 %v51
    %77 = vmatpush.msra.mxu0 %v50
    %78 = vmatpush.msra.mxu0 %v49
    %79 = vmatpush.msra.mxu0 %v48
    %80 = vmatpush.msra.mxu0 %v47
    %81 = vmatpush.msra.mxu0 %v46
    %82 = vmatmul.f32.gmra.mxu0 %v45
    %v83 = vpop.f32.mrf.mxu0
    %v84 = vadd.f32 %v64, %v83
    %85 = vdwg.mxu0
    %v86 = vtanh.pop %v84
    %87 = vst [vmem:[#allocation7] sm:$0xff] %v86
    // Predicated region
    $region22: #{tpu_custom_call.1} parent=1 // pred_check
      _
    $region23: #{tpu_custom_call.1} parent=1 // pred_check_branch
      %89 = sbr.rel (0) target = $region25
    $region24: #{tpu_custom_call.1} parent=1 // pred_region
      %91 = vsyncadd [#allocation4], 0
      %s93 = sshll.u32 [#allocation7], 4
      %s94 = int_to_ptr.vmem [resolvable:$true] %s93
      %s95 = sshll.u32 %s3, 4
      %s96 = int_to_ptr.hbm [resolvable:$true] %s95
      %98 = dma.vmem_to_hbm [thread:$0]  %s94, 128, %s96, [#allocation4]
    $region25: #{tpu_custom_call.1} parent=1 // pred_fallthru
      _
    // Predicated region
    $region26: #{tpu_custom_call.1} parent=1 // pred_check
      _
    $region27: #{tpu_custom_call.1} parent=1 // pred_check_branch
      %100 = sbr.rel (0) target = $region29
    $region28: #{tpu_custom_call.1} parent=1 // pred_region
      %102 = dma.done [#allocation4], 128
    $region29: #{tpu_custom_call.1} parent=1 // pred_fallthru
      _
    %103 = vsyncpa [#allocation3], 1
    %104 = vsyncpa [#allocation6], 1
    %105 = vsyncpa [#allocation4], 1

</llo_original>
